<compile_context>
chip_gen: v6e
topology: v6e:2x2x1
jax: 0.10.0
libtpu: 0.0.40
codegen_flags: <defaults>
</compile_context>

<pallas_src>
import functools
import math

import jax
import jax.numpy as jnp
import numpy as np
from jax.experimental import pallas as pl
from jax.experimental.pallas import tpu as pltpu


def _rmsnorm_kernel(x_ref, g_ref, o_ref, *, eps: float, sqrt_c: float):
    x = x_ref[...].astype(jnp.float32)                  # (bb, C, bl)
    # Sum of squares over the channel (sublane) axis.
    sumsq = jnp.sum(x * x, axis=1, keepdims=True)       # (bb, 1, bl)
    # F.normalize(dim=1): x / max(||x||_2, eps), folded with the sqrt(C)
    # factor into one EUP rsqrt on the narrow (bb, 1, bl) slice.
    inv = sqrt_c * jax.lax.rsqrt(jnp.maximum(sumsq, eps * eps))
    g = g_ref[...].astype(jnp.float32)                  # (1, C, 1)
    o_ref[...] = (x * g * inv).astype(o_ref.dtype)


# Per-buffer tile budget: 4 MiB is past the measured HBM-roofline knee on all
# generations and, double-buffered for x and out (+ f32 upcast temp for bf16
# inputs), stays comfortably inside v7x's 64 MiB physical VMEM.
_TARGET_BLOCK_BYTES = 4 << 20


def _round_up(x, m):
    return (x + m - 1) // m * m


def _pick_block_l(L, C, itemsize, target_bytes):
    """Lane-dense L tile; prefer the full-L contiguous slab when it fits."""
    if C * L * itemsize <= target_bytes:
        return L                                   # full-L contiguous slab
    per_col = C * itemsize
    max_bl = max(128, (target_bytes // per_col) // 128 * 128)
    block_l = min(max_bl, _round_up(L, 128))
    if block_l >= L:
        return L                                   # full dim is always valid
    if L % 128 == 0 and L % block_l != 0:
        # Prefer an exact divisor (no masked edge) if it isn't much smaller;
        # never collapse to a tiny strided block for awkward L (128 * prime).
        d = block_l
        while d >= 128 and L % d:
            d -= 128
        if d >= max(128, block_l // 2):
            block_l = d
    return block_l


def _pick_block_b(B, C, L, block_l, itemsize, target_bytes):
    """Pack batch rows only once block_l == L, keeping >= 2 grid steps."""
    if block_l != L or B == 1:
        return 1
    per_b = C * L * itemsize
    block_b = int(max(1, min(B, target_bytes // per_b)))
    if block_b >= B:
        # Keep an even, >= 2 step grid so both v7x TensorCores get work.
        block_b = pl.cdiv(B, 2)
    return int(block_b)


def rmsnorm(x, g, *, eps: float = 1e-12, block_b=None, block_l=None):
    """x: (B, C, L), g: (1, C, 1) -> (B, C, L). Matches F.normalize(x,1)*g*sqrt(C)."""
    B, C, L = x.shape
    assert g.shape == (1, C, 1)
    itemsize = jnp.dtype(x.dtype).itemsize
    target_bytes = _TARGET_BLOCK_BYTES

    if block_l is None:
        block_l = _pick_block_l(L, C, itemsize, target_bytes)
    if block_b is None:
        block_b = _pick_block_b(B, C, L, block_l, itemsize, target_bytes)

    grid = (pl.cdiv(B, block_b), pl.cdiv(L, block_l))

    # Explicit VMEM budget: double-buffered x + out tiles, f32 upcast temp for
    # non-f32 inputs, plus slack.  Clamped so it is always safe on v7x (64 MiB
    # physical) while overriding the small scoped defaults on v5e/v6e.
    block_bytes = block_b * C * block_l * itemsize
    f32_temp = 0 if jnp.dtype(x.dtype) == jnp.float32 else block_b * C * block_l * 4
    vmem_need = 4 * block_bytes + f32_temp + (2 << 20)
    vmem_limit = int(min(max(vmem_need, 16 << 20), 48 << 20))

    kernel = functools.partial(_rmsnorm_kernel, eps=eps, sqrt_c=float(math.sqrt(C)))

    n = B * C * L
    cost = pl.CostEstimate(
        flops=4 * n,
        transcendentals=B * L,
        bytes_accessed=2 * n * itemsize + C * jnp.dtype(g.dtype).itemsize,
    )

    return pl.pallas_call(
        kernel,
        out_shape=jax.ShapeDtypeStruct((B, C, L), x.dtype),
        grid_spec=pltpu.PrefetchScalarGridSpec(
            num_scalar_prefetch=0,
            grid=grid,
            in_specs=[
                pl.BlockSpec((block_b, C, block_l), lambda i, j: (i, 0, j)),
                pl.BlockSpec((1, C, 1), lambda i, j: (0, 0, 0)),
            ],
            out_specs=pl.BlockSpec((block_b, C, block_l), lambda i, j: (i, 0, j)),
        ),
        compiler_params=pltpu.CompilerParams(
            dimension_semantics=("parallel", "parallel"),
            vmem_limit_bytes=vmem_limit,
        ),
        cost_estimate=cost,
    )(x, g)


def reference_rmsnorm(x, g, *, eps: float = 1e-12):
    """Pure-JAX replica of the PyTorch forward: F.normalize(x, dim=1) * g * sqrt(C)."""
    xf = x.astype(jnp.float32)
    norm = jnp.sqrt(jnp.sum(xf * xf, axis=1, keepdims=True))
    y = xf / jnp.maximum(norm, eps)
    return (y * g.astype(jnp.float32) * (x.shape[1] ** 0.5)).astype(x.dtype)


if __name__ == "__main__":
    key = jax.random.PRNGKey(0)
    k0, k1, k2, k3 = jax.random.split(key, 4)

    # Small shapes consistent with the module: (batch, channels, seq).
    B, C, L = 2, 32, 128
    x = jax.random.normal(k0, (B, C, L), jnp.float32)
    g = 1.0 + 0.1 * jax.random.normal(k1, (1, C, 1), jnp.float32)

    out = jax.block_until_ready(rmsnorm(x, g))
    ref = reference_rmsnorm(x, g)
    np.testing.assert_allclose(np.asarray(out), np.asarray(ref), rtol=1e-5, atol=1e-5)

    # Non-128-multiple L path (full-width block) also works.
    x2 = jax.random.normal(k2, (2, 32, 80), jnp.float32)
    out2 = jax.block_until_ready(rmsnorm(x2, g))
    ref2 = reference_rmsnorm(x2, g)
    np.testing.assert_allclose(np.asarray(out2), np.asarray(ref2), rtol=1e-5, atol=1e-5)

    # bf16 input: f32 accumulation in-kernel, bf16 output.
    x3 = jax.random.normal(k3, (4, 32, 256), jnp.bfloat16)
    out3 = jax.block_until_ready(rmsnorm(x3, g.astype(jnp.bfloat16)))
    ref3 = reference_rmsnorm(x3, g.astype(jnp.bfloat16))
    np.testing.assert_allclose(
        np.asarray(out3, dtype=np.float32),
        np.asarray(ref3, dtype=np.float32),
        rtol=2e-2, atol=2e-2,
    )

    print("KERNEL_OK")
</pallas_src>

<mosaic_0001>
module attributes {stable_mosaic.version = 11 : i64} {
  func.func @_rmsnorm_kernel(%arg0: i32, %arg1: i32, %arg2: memref<1x32x128xf32, #tpu.memory_space<vmem>>, %arg3: memref<1x32x1xf32, #tpu.memory_space<vmem>>, %arg4: memref<1x32x128xf32, #tpu.memory_space<vmem>>) attributes {dimension_semantics = [#tpu.dimension_semantics<parallel>, #tpu.dimension_semantics<parallel>], iteration_bounds = array<i64: 2, 1>, scalar_prefetch = 0 : i64, scratch_operands = 0 : i64, tpu.core_type = #tpu.core_type<tc>, window_params = [{transform_indices = @transform_0, window_bounds = array<i64: 1, 32, 128>}, {pipeline_mode = #tpu.pipeline_mode<synchronous>, transform_indices = @transform_1, window_bounds = array<i64: 1, 32, 1>}, {transform_indices = @transform_2, window_bounds = array<i64: 1, 32, 128>}]} {
    %c0 = arith.constant 0 : index
    %c0_0 = arith.constant 0 : index
    %c0_1 = arith.constant 0 : index
    %0 = vector.load %arg2[%c0, %c0_0, %c0_1] : memref<1x32x128xf32, #tpu.memory_space<vmem>>, vector<1x32x128xf32>
    %1 = arith.mulf %0, %0 : vector<1x32x128xf32>
    %cst = arith.constant dense<0.000000e+00> : vector<1x128xf32>
    %2 = vector.multi_reduction <add>, %1, %cst [1] : vector<1x32x128xf32> to vector<1x128xf32>
    %3 = vector.shape_cast %2 : vector<1x128xf32> to vector<1x1x128xf32>
    %cst_2 = arith.constant 1.000000e-24 : f32
    %4 = vector.broadcast %cst_2 : f32 to vector<1x1x128xf32>
    %5 = arith.maximumf %3, %4 : vector<1x1x128xf32>
    %6 = math.rsqrt %5 : vector<1x1x128xf32>
    %cst_3 = arith.constant 5.65685415 : f32
    %7 = vector.broadcast %cst_3 : f32 to vector<1x1x128xf32>
    %8 = arith.mulf %7, %6 : vector<1x1x128xf32>
    %c0_4 = arith.constant 0 : index
    %c0_5 = arith.constant 0 : index
    %c0_6 = arith.constant 0 : index
    %9 = vector.load %arg3[%c0_4, %c0_5, %c0_6] : memref<1x32x1xf32, #tpu.memory_space<vmem>>, vector<1x32x1xf32>
    %10 = vector.broadcast %9 : vector<1x32x1xf32> to vector<1x32x128xf32>
    %11 = arith.mulf %0, %10 : vector<1x32x128xf32>
    %12 = vector.broadcast %8 : vector<1x1x128xf32> to vector<1x32x128xf32>
    %13 = arith.mulf %11, %12 : vector<1x32x128xf32>
    %c0_7 = arith.constant 0 : index
    %c0_8 = arith.constant 0 : index
    %c0_9 = arith.constant 0 : index
    %14 = vector.load %arg4[%c0_7, %c0_8, %c0_9] : memref<1x32x128xf32, #tpu.memory_space<vmem>>, vector<1x32x128xf32>
    tpu.vector_store %arg4[%c0_7, %c0_8, %c0_9], %13 {strides = array<i32>} : memref<1x32x128xf32, #tpu.memory_space<vmem>>, vector<1x32x128xf32>,
    return
  }
  func.func @transform_0(%arg0: i32, %arg1: i32) -> (i32, i32, i32) {
    %c0_i32 = arith.constant 0 : i32
    %c0_i32_0 = arith.constant 0 : i32
    return %arg0, %c0_i32, %arg1 : i32, i32, i32
  }
  func.func @transform_1(%arg0: i32, %arg1: i32) -> (i32, i32, i32) {
    %c0_i32 = arith.constant 0 : i32
    %c0_i32_0 = arith.constant 0 : i32
    %c0_i32_1 = arith.constant 0 : i32
    %c0_i32_2 = arith.constant 0 : i32
    return %c0_i32, %c0_i32_0, %c0_i32_1 : i32, i32, i32
  }
  func.func @transform_2(%arg0: i32, %arg1: i32) -> (i32, i32, i32) {
    %c0_i32 = arith.constant 0 : i32
    %c0_i32_0 = arith.constant 0 : i32
    return %arg0, %c0_i32, %arg1 : i32, i32, i32
  }
}

</mosaic_0001>

<llo_original>
// kernel: tpu_custom_call.1
$region0: #{tpu_custom_call.1}
  #allocation0 [shape = 'u32[]', space=smem, size = 0x4, offset = 0x4, fixed_abs, tag = 'smem constant byte address 0x4 - core index']
  #allocation1 [shape = 'u32[144,128]{1,0:T(1,128)}', space=vmem, size = 0x12000, scoped, tag = 'internal scratch']
  %s0 = inlined_call_operand.hbm [shape: f32[2,32,128], index: 0, kind: input, shape index: {}]
  %s1 = inlined_call_operand.vmem [shape: f32[1,32,1], index: 1, kind: input, shape index: {}]
  %s2 = inlined_call_operand.hbm [shape: f32[2,32,128], index: 2, kind: output, shape index: {}]
  %s3 = sld [smem:[#allocation0]]
  $region45: #{tpu_custom_call.1} parent=0
    _
  %s5 = ssub.s32 1, %s3
  %s6 = scalar_select 0, %s5, %s3
  $region1: #{tpu_custom_call.1} parent=0
    #allocation2 [shape = 'u8[32768]{0}', space=vmem, size = 0x8000, scoped, tag = 'input window, operand 0']
    #allocation3 [shape = 's32[2]{0}', space=sflag, size = 0x8, scoped, tag = 'scoped memory for tpu_custom_call.1']
    #allocation4 [shape = 's32[2]{0}', space=sflag, size = 0x8, scoped, tag = 'scoped memory for tpu_custom_call.1']
    #allocation5 [shape = 'u8[32768]{0}', space=vmem, size = 0x8000, scoped, tag = 'output window, operand 0']
    %7 = vsyncpa [#allocation3], 0
    %s8 = scalar_lea.sflag [#allocation3], 1
    %9 = vsyncpa %s8, 0
    %10 = vsyncpa [#allocation4], 0
    %s11 = scalar_lea.sflag [#allocation4], 1
    %12 = vsyncpa %s11, 0
    loop: start=0, step=1, limit=4
    $region2: #{tpu_custom_call.1} parent=1 // loop_pre_header
      _
    $region3: #{tpu_custom_call.1} parent=1 // loop_header
      %s14 = sphi 0, %s18
      %p15 = scmp.ge.s32.totalorder %s14, 4
      %s21 = sphi 0, %s33
      %s22 = sphi 0, %s29
      %s23 = sphi 0, %s21
      %s24 = sphi 0, %s22
      %s25 = sphi 0, %s23
      %s26 = sphi 0, %s24
      %s38 = sphi 0, %s40
      %s41 = sphi 0, %s38
      %s42 = sphi 0, %s41
      %s58 = sphi 0, %s42
      %s62 = sphi 0, %s62
      %s64 = sphi 0, %s62
      %s65 = sphi 0, %s64
      %s79 = sphi 0, %s65
      %s87 = sphi 0, %s89
      %s90 = sphi 0, %s87
      %s91 = sphi 0, %s90
      %s107 = sphi 0, %s91
    $region4: #{tpu_custom_call.1} parent=1 // loop_header_branch
      %17 = sbr.rel (%p15) target = $region8
    $region5: #{tpu_custom_call.1} parent=1 // loop_body
      %s19 = ssub.s32 %s14, 1
      %s20 = ssub.s32 %s14, 2
      %s27 = sadd.s32 1, %s22
      %p28 = scmp.ge.s32.totalorder %s27, 1
      %s29 = scalar_select %p28, 0, %s27
      %s30 = sadd.s32 1, %s21
      %s31 = scalar_select %p28, %s30, %s21
      %p32 = scmp.ge.s32.totalorder %s31, 2
      %s33 = scalar_select %p32, 0, %s31
      %s34 = ssub.s32 %s21, %s33
      %s35 = ssub.s32 %s22, %s29
      %s36 = sor.u32 %s34, %s35
      %p37 = scmp.eq.s32.totalorder %s36, 0
      %s39 = sadd.s32 %s38, 1
      %s40 = scalar_select %p37, %s38, %s39
      %p43 = pneg %p37
      %p44 = scmp.eq.s32.totalorder %s14, 1
      %p45 = por %p43, %p44
      %p46 = scmp.ne.s32.totalorder %s38, %s41
      %p47 = scmp.eq.s32.totalorder %s14, 0
      %p48 = por %p46, %p47
      %p49 = scmp.ne.s32.totalorder %s38, %s41
      %p50 = scmp.eq.s32.totalorder %s19, 1
      %p51 = por %p49, %p50
      %p52 = scmp.ne.s32.totalorder %s41, %s42
      %p53 = scmp.eq.s32.totalorder %s19, 0
      %p54 = por %p52, %p53
      %p55 = scmp.ne.s32.totalorder %s41, %s42
      %p56 = scmp.eq.s32.totalorder %s20, 1
      %p57 = por %p55, %p56
      %p59 = scmp.ne.s32.totalorder %s42, %s58
      %p60 = scmp.eq.s32.totalorder %s20, 0
      %p61 = por %p59, %p60
      %s63 = sadd.s32 %s62, 1
      %p66 = scmp.eq.s32.totalorder %s14, 1
      %p67 = scmp.ne.s32.totalorder %s62, %s64
      %p68 = scmp.eq.s32.totalorder %s14, 0
      %p69 = por %p67, %p68
      %p70 = scmp.ne.s32.totalorder %s62, %s64
      %p71 = scmp.eq.s32.totalorder %s19, 1
      %p72 = por %p70, %p71
      %p73 = scmp.ne.s32.totalorder %s64, %s65
      %p74 = scmp.eq.s32.totalorder %s19, 0
      %p75 = por %p73, %p74
      %p76 = scmp.ne.s32.totalorder %s64, %s65
      %p77 = scmp.eq.s32.totalorder %s20, 1
      %p78 = por %p76, %p77
      %p80 = scmp.ne.s32.totalorder %s65, %s79
      %p81 = scmp.eq.s32.totalorder %s20, 0
      %p82 = por %p80, %p81
      %s83 = ssub.s32 %s21, %s33
      %s84 = ssub.s32 %s22, %s29
      %s85 = sor.u32 %s83, %s84
      %p86 = scmp.eq.s32.totalorder %s85, 0
      %s88 = sadd.s32 %s87, 1
      %s89 = scalar_select %p86, %s87, %s88
      %p92 = pneg %p86
      %p93 = scmp.eq.s32.totalorder %s14, 1
      %p94 = por %p92, %p93
      %p95 = scmp.ne.s32.totalorder %s87, %s90
      %p96 = scmp.eq.s32.totalorder %s14, 0
      %p97 = por %p95, %p96
      %p98 = scmp.ne.s32.totalorder %s87, %s90
      %p99 = scmp.eq.s32.totalorder %s19, 1
      %p100 = por %p98, %p99
      %p101 = scmp.ne.s32.totalorder %s90, %s91
      %p102 = scmp.eq.s32.totalorder %s19, 0
      %p103 = por %p101, %p102
      %p104 = scmp.ne.s32.totalorder %s90, %s91
      %p105 = scmp.eq.s32.totalorder %s20, 1
      %p106 = por %p104, %p105
      %p108 = scmp.ne.s32.totalorder %s91, %s107
      %p109 = scmp.eq.s32.totalorder %s20, 0
      %p110 = por %p108, %p109
      %p111 = scmp.le.s32.totalorder 1, %s14
      %p112 = scmp.lt.s32.totalorder %s14, 3
      %p113 = pnand %p111, %p112
      %p114 = pneg %p113
      // Predicated region
      $region9: #{tpu_custom_call.1} parent=5 // pred_check
        _
      $region10: #{tpu_custom_call.1} parent=5 // pred_check_branch
        %116 = sbr.rel (%p113) target = $region12
      $region11: #{tpu_custom_call.1} parent=5 // pred_region
        %s117 = ssub.s32 %s14, 1
        // Predicated region
        $region13: #{tpu_custom_call.1} parent=11 // pred_check
          %p118 = pneg %p75
        $region14: #{tpu_custom_call.1} parent=11 // pred_check_branch
          %120 = sbr.rel (%p118) target = $region16
        $region15: #{tpu_custom_call.1} parent=11 // pred_region
          _
        $region16: #{tpu_custom_call.1} parent=11 // pred_fallthru
          _
      $region12: #{tpu_custom_call.1} parent=5 // pred_fallthru
        _
      %p121 = scmp.lt.s32.totalorder %s14, 2
      // Predicated region
      $region17: #{tpu_custom_call.1} parent=5 // pred_check
        %p122 = pneg %p121
      $region18: #{tpu_custom_call.1} parent=5 // pred_check_branch
        %124 = sbr.rel (%p122) target = $region20
      $region19: #{tpu_custom_call.1} parent=5 // pred_region
        // Predicated region
        $region21: #{tpu_custom_call.1} parent=19 // pred_check
          %p125 = pneg %p48
        $region22: #{tpu_custom_call.1} parent=19 // pred_check_branch
          %127 = sbr.rel (%p125) target = $region24
        $region23: #{tpu_custom_call.1} parent=19 // pred_region
          %s128 = sand.u32 %s38, 1
          %s129 = scalar_lea.sflag [#allocation3], %s128
          %s130 = sand.u32 %s38, 1
          %s131 = smul.addr %s130, 32
          %s132 = scalar_lea.vmem [#allocation2], %s131
          %s134 = ssub.s32 512, 512
          %135 = vsyncadd %s129, %s134
          %s136 = smul.addr %s21, 4
          %s137 = sadd.s32 %s22, %s136
          %s138 = smul.addr %s137, 128
          %s139 = scalar_lea.hbm %s0, %s138
          %s140 = sshll.u32 %s132, 4
          %s141 = int_to_ptr.vmem [resolvable:$true] %s140
          %146 = dma.hbm_to_vmem [thread:$0]  %s139, 512, %s141, %s129, 128, 128, 8
        $region24: #{tpu_custom_call.1} parent=19 // pred_fallthru
          _
      $region20: #{tpu_custom_call.1} parent=5 // pred_fallthru
        _
      %p147 = scmp.le.s32.totalorder 1, %s14
      %p148 = scmp.lt.s32.totalorder %s14, 3
      %p149 = pnand %p147, %p148
      %p150 = pneg %p149
      // Predicated region
      $region25: #{tpu_custom_call.1} parent=5 // pred_check
        _
      $region26: #{tpu_custom_call.1} parent=5 // pred_check_branch
        %152 = sbr.rel (%p149) target = $region28
      $region27: #{tpu_custom_call.1} parent=5 // pred_region
        %s153 = ssub.s32 %s14, 1
        %s154 = sand.u32 %s41, 1
        %s155 = scalar_lea.sflag [#allocation3], %s154
        %s156 = sand.u32 %s41, 1
        %s157 = smul.addr %s156, 32
        %s158 = scalar_lea.vmem [#allocation2], %s157
        // Predicated region
        $region29: #{tpu_custom_call.1} parent=27 // pred_check
          %p159 = pneg %p54
        $region30: #{tpu_custom_call.1} parent=27 // pred_check_branch
          %161 = sbr.rel (%p159) target = $region32
        $region31: #{tpu_custom_call.1} parent=27 // pred_region
          %162 = dma.done %s155, 512
        $region32: #{tpu_custom_call.1} parent=27 // pred_fallthru
          _
        %s163 = sand.u32 %s41, 1
        %s164 = scalar_lea.sflag [#allocation3], %s163
        %s165 = sand.u32 %s41, 1
        %s166 = smul.addr %s165, 32
        %s167 = scalar_lea.vmem [#allocation2], %s166
        %p168 = pneg %p54
        %p169 = pneg %p51
        %p170 = pneg %p75
        %p171 = pneg %p72
        %p172 = pneg %p103
        %p173 = pneg %p100
        %s174 = sand.u32 %s90, 1
        %s175 = scalar_lea.sflag [#allocation4], %s174
        %s176 = sand.u32 %s90, 1
        %s177 = smul.addr %s176, 32
        %s178 = scalar_lea.vmem [#allocation5], %s177
        %v179 = vld [vmem:[%s158] sm:$0xff]
        %v180 = vld [vmem:[%s158 + $0x8] sm:$0xff]
        %v181 = vld [vmem:[%s158 + $0x10] sm:$0xff]
        %v182 = vld [vmem:[%s158 + $0x18] sm:$0xff]
        %v183 = vmul.f32 %v179, %v179
        %v184 = vmul.f32 %v180, %v180
        %v185 = vmul.f32 %v181, %v181
        %v186 = vmul.f32 %v182, %v182
        %v187 = vadd.f32 %v183, %v184
        %v188 = vadd.f32 %v187, %v185
        %v189 = vadd.f32 %v188, %v186
        %v190 = vrot.slane %v189, 4
        %v191 = vadd.f32 %v189, %v190
        %v192 = vrot.slane %v191, 2
        %v193 = vadd.f32 %v191, %v192
        %v194 = vrot.slane %v193, 1
        %v195 = vadd.f32 %v193, %v194
        %v196 = vmax.f32 %v195, 1e-24
        %v197 = vrsqrt.pop %v196
        %v198 = vmul.f32 %v197, 5.656854
        %v199 = vld [vmem:[%s1] sm:$0xff]
        %v200 = vld [vmem:[%s1 + $0x8] sm:$0xff]
        %v201 = vld [vmem:[%s1 + $0x10] sm:$0xff]
        %v202 = vld [vmem:[%s1 + $0x18] sm:$0xff]
        %204 = vset.pattern.permute.xlu0 0
        %205 = vperm.xlu0 %204, %v199
        %v206 = vpop.permute.xlu0 %205
        %209 = vset.pattern.permute.xlu0 0
        %210 = vperm.xlu0 %209, %v200
        %v211 = vpop.permute.xlu0 %210
        %214 = vset.pattern.permute.xlu0 0
        %215 = vperm.xlu0 %214, %v201
        %v216 = vpop.permute.xlu0 %215
        %219 = vset.pattern.permute.xlu0 0
        %220 = vperm.xlu0 %219, %v202
        %v221 = vpop.permute.xlu0 %220
        %v223 = vmul.f32 %v179, %v206
        %v224 = vmul.f32 %v180, %v211
        %v225 = vmul.f32 %v181, %v216
        %v226 = vmul.f32 %v182, %v221
        %v227 = vmul.f32 %v223, %v198
        %v228 = vmul.f32 %v224, %v198
        %v229 = vmul.f32 %v225, %v198
        %v230 = vmul.f32 %v226, %v198
        %231 = vst [vmem:[%s178] sm:$0xff] %v227
        %232 = vst [vmem:[%s178 + $0x8] sm:$0xff] %v228
        %233 = vst [vmem:[%s178 + $0x10] sm:$0xff] %v229
        %234 = vst [vmem:[%s178 + $0x18] sm:$0xff] %v230
        %s235 = sand.u32 %s90, 1
        %s236 = scalar_lea.sflag [#allocation4], %s235
        %s237 = sand.u32 %s90, 1
        %s238 = smul.addr %s237, 32
        %s239 = scalar_lea.vmem [#allocation5], %s238
        // Predicated region
        $region33: #{tpu_custom_call.1} parent=27 // pred_check
          %p240 = pneg %p100
        $region34: #{tpu_custom_call.1} parent=27 // pred_check_branch
          %242 = sbr.rel (%p240) target = $region36
        $region35: #{tpu_custom_call.1} parent=27 // pred_region
          %s244 = ssub.s32 512, 512
          %245 = vsyncadd %s236, %s244
          %s246 = smul.addr %s23, 4
          %s247 = sadd.s32 %s24, %s246
          %s248 = smul.addr %s247, 128
          %s249 = scalar_lea.hbm %s2, %s248
          %s250 = sshll.u32 %s239, 4
          %s251 = int_to_ptr.vmem [resolvable:$true] %s250
          %256 = dma.vmem_to_hbm [thread:$0]  %s251, 512, %s249, %s236, 128, 128, 8
        $region36: #{tpu_custom_call.1} parent=27 // pred_fallthru
          _
      $region28: #{tpu_custom_call.1} parent=5 // pred_fallthru
        _
      %p257 = scmp.le.s32.totalorder 2, %s14
      // Predicated region
      $region37: #{tpu_custom_call.1} parent=5 // pred_check
        %p258 = pneg %p257
      $region38: #{tpu_custom_call.1} parent=5 // pred_check_branch
        %260 = sbr.rel (%p258) target = $region40
      $region39: #{tpu_custom_call.1} parent=5 // pred_region
        %s261 = ssub.s32 %s14, 2
        // Predicated region
        $region41: #{tpu_custom_call.1} parent=39 // pred_check
          %p262 = pneg %p106
        $region42: #{tpu_custom_call.1} parent=39 // pred_check_branch
          %264 = sbr.rel (%p262) target = $region44
        $region43: #{tpu_custom_call.1} parent=39 // pred_region
          %s265 = sand.u32 %s91, 1
          %s266 = scalar_lea.sflag [#allocation4], %s265
          %s267 = sand.u32 %s91, 1
          %s268 = smul.addr %s267, 32
          %s269 = scalar_lea.vmem [#allocation5], %s268
          %270 = dma.done %s266, 512
        $region44: #{tpu_custom_call.1} parent=39 // pred_fallthru
          _
      $region40: #{tpu_custom_call.1} parent=5 // pred_fallthru
        _
    $region6: #{tpu_custom_call.1} parent=1 // loop_footer
      %s18 = sadd.s32 1, %s14
    $region7: #{tpu_custom_call.1} parent=1 // loop_footer_branch
      %13 = sbr.rel target = $region3
    $region8: #{tpu_custom_call.1} parent=1 // loop_exit
      _
    %271 = vsyncpa [#allocation3], 1
    %s272 = scalar_lea.sflag [#allocation3], 1
    %273 = vsyncpa %s272, 1
    %274 = vsyncpa [#allocation4], 1
    %s275 = scalar_lea.sflag [#allocation4], 1
    %276 = vsyncpa %s275, 1

</llo_original>
